<compile_context>
chip_gen: v7x
topology: tpu7x:2x2x1
jax: 0.10.0
libtpu: 0.0.40
codegen_flags: <defaults>
</compile_context>

<pallas_src>
import functools

import jax
import jax.numpy as jnp
from jax.experimental import pallas as pl
from jax.experimental.pallas import tpu as pltpu


def appnp_kernel(adj_ref, x_ref, w1_ref, b1_ref, w2_ref, b2_ref, o_ref,
                 *, K, alpha):
    # ---- MLP (classifier first — APPNP structure) ----------------------
    bf = jnp.bfloat16
    h = jnp.dot(x_ref[...].astype(bf), w1_ref[...].astype(bf),
                preferred_element_type=jnp.float32)
    h = jnp.maximum(h + b1_ref[...], 0.0)                     # relu(lin1(x))
    x0 = jnp.dot(h.astype(bf), w2_ref[...].astype(bf),
                 preferred_element_type=jnp.float32)
    x0 = x0 + b2_ref[...]                                     # lin2(.)  (lane-padded)

    # ---- K-hop personalized-PageRank propagation ------------------------
    adj = adj_ref[...]                                         # already bf16
    teleport = alpha * x0                                      # hoisted out of loop
    one_m_a = jnp.float32(1.0 - alpha)
    z = x0
    for _ in range(K):                                         # K is small & static
        z = one_m_a * jnp.dot(adj, z.astype(bf),
                              preferred_element_type=jnp.float32) + teleport

    o_ref[...] = z.astype(o_ref.dtype)


def appnp_forward(x, adj, w1, b1, w2, b2, *, K=10, alpha=0.1):
    """x: (N, in_f), adj: (N, N) dense row-normalized,
    w1: (hidden, in_f), b1: (hidden,), w2: (n_class, hidden), b2: (n_class,)."""
    N, in_f = x.shape
    hidden = w1.shape[0]
    n_class = w2.shape[0]

    # Lane-dense output: pad class dim to a multiple of 128 (zeros propagate
    # as zeros through the hop loop; sliced off below).
    c_pad = ((n_class + 127) // 128) * 128

    w1_t = w1.T                                                # (in_f, hidden)
    b1_r = b1.reshape(1, hidden)
    w2_t = jnp.zeros((hidden, c_pad), x.dtype).at[:, :n_class].set(w2.T)
    b2_r = jnp.zeros((1, c_pad), x.dtype).at[0, :n_class].set(b2)

    # bf16 adjacency: halves HBM/VMEM traffic on the dominant input.
    adj_bf = adj.astype(jnp.bfloat16)

    flops = (2 * N * in_f * hidden            # lin1
             + 2 * N * hidden * c_pad         # lin2
             + K * 2 * N * N * c_pad)         # K propagation hops
    bytes_accessed = (adj_bf.size * 2 + x.size * 4 + w1_t.size * 4
                      + b1_r.size * 4 + w2_t.size * 4 + b2_r.size * 4
                      + N * c_pad * 4)

    out = pl.pallas_call(
        functools.partial(appnp_kernel, K=K, alpha=alpha),
        out_shape=jax.ShapeDtypeStruct((N, c_pad), x.dtype),
        grid=(1,),
        in_specs=[
            pl.BlockSpec((N, N), lambda i: (0, 0)),            # adj (bf16)
            pl.BlockSpec((N, in_f), lambda i: (0, 0)),         # x
            pl.BlockSpec((in_f, hidden), lambda i: (0, 0)),    # W1^T
            pl.BlockSpec((1, hidden), lambda i: (0, 0)),       # b1
            pl.BlockSpec((hidden, c_pad), lambda i: (0, 0)),   # W2^T (padded)
            pl.BlockSpec((1, c_pad), lambda i: (0, 0)),        # b2  (padded)
        ],
        out_specs=pl.BlockSpec((N, c_pad), lambda i: (0, 0)),
        compiler_params=pltpu.CompilerParams(
            dimension_semantics=("arbitrary",),
            vmem_limit_bytes=64 * 1024 * 1024),
        cost_estimate=pl.CostEstimate(flops=flops, transcendentals=0,
                                      bytes_accessed=bytes_accessed),
    )(adj_bf, x, w1_t, b1_r, w2_t, b2_r)

    out = out[:, :n_class]
    # torch .squeeze(1): only drops dim 1 when it has size 1
    if out.shape[1] == 1:
        out = out.squeeze(1)
    return out


if __name__ == "__main__":
    key = jax.random.PRNGKey(0)
    k_x, k_adj, k_w1, k_b1, k_w2, k_b2 = jax.random.split(key, 6)

    # Small, module-consistent shapes
    N, in_f, hidden, n_class = 64, 32, 32, 8
    K, alpha = 10, 0.1

    x = jax.random.normal(k_x, (N, in_f), dtype=jnp.float32)

    # Deterministic symmetric row-normalized dense adjacency
    a = (jax.random.uniform(k_adj, (N, N)) < 0.1).astype(jnp.float32)
    a = jnp.maximum(a, a.T) + jnp.eye(N, dtype=jnp.float32)
    deg = jnp.sum(a, axis=1, keepdims=True)
    adj = a / deg

    # nn.Linear init: uniform(-1/sqrt(fan_in), 1/sqrt(fan_in))
    bound1 = 1.0 / jnp.sqrt(jnp.float32(in_f))
    w1 = jax.random.uniform(k_w1, (hidden, in_f), jnp.float32, -bound1, bound1)
    b1 = jax.random.uniform(k_b1, (hidden,), jnp.float32, -bound1, bound1)
    bound2 = 1.0 / jnp.sqrt(jnp.float32(hidden))
    w2 = jax.random.uniform(k_w2, (n_class, hidden), jnp.float32, -bound2, bound2)
    b2 = jax.random.uniform(k_b2, (n_class,), jnp.float32, -bound2, bound2)

    out = appnp_forward(x, adj, w1, b1, w2, b2, K=K, alpha=alpha)
    out = jax.block_until_ready(out)

    # Pure-JAX f32 reference (module semantics, eval mode).
    h_ref = jnp.maximum(x @ w1.T + b1, 0.0)
    x0_ref = h_ref @ w2.T + b2
    z_ref = x0_ref
    for _ in range(K):
        z_ref = (1.0 - alpha) * (adj @ z_ref) + alpha * x0_ref

    assert out.shape == (N, n_class), out.shape
    # Loosened tolerance: kernel feeds the MXU bf16 operands (f32 accumulate);
    # row-normalized adj keeps values <=1 so error stays well under 2e-2 here.
    assert jnp.allclose(out, z_ref, atol=2e-2, rtol=2e-2), "mismatch vs reference"

    print("KERNEL_OK")
</pallas_src>

<mosaic_0001>
module attributes {stable_mosaic.version = 11 : i64} {
  func.func @appnp_kernel(%arg0: i32, %arg1: memref<64x64xbf16, #tpu.memory_space<vmem>>, %arg2: memref<64x32xf32, #tpu.memory_space<vmem>>, %arg3: memref<32x32xf32, #tpu.memory_space<vmem>>, %arg4: memref<1x32xf32, #tpu.memory_space<vmem>>, %arg5: memref<32x128xf32, #tpu.memory_space<vmem>>, %arg6: memref<1x128xf32, #tpu.memory_space<vmem>>, %arg7: memref<64x128xf32, #tpu.memory_space<vmem>>) attributes {dimension_semantics = [#tpu.dimension_semantics<arbitrary>], iteration_bounds = array<i64: 1>, scalar_prefetch = 0 : i64, scratch_operands = 0 : i64, tpu.core_type = #tpu.core_type<tc>, window_params = [{pipeline_mode = #tpu.pipeline_mode<synchronous>, transform_indices = @transform_0, window_bounds = array<i64: 64, 64>}, {pipeline_mode = #tpu.pipeline_mode<synchronous>, transform_indices = @transform_1, window_bounds = array<i64: 64, 32>}, {pipeline_mode = #tpu.pipeline_mode<synchronous>, transform_indices = @transform_2, window_bounds = array<i64: 32, 32>}, {pipeline_mode = #tpu.pipeline_mode<synchronous>, transform_indices = @transform_3, window_bounds = array<i64: 1, 32>}, {pipeline_mode = #tpu.pipeline_mode<synchronous>, transform_indices = @transform_4, window_bounds = array<i64: 32, 128>}, {pipeline_mode = #tpu.pipeline_mode<synchronous>, transform_indices = @transform_5, window_bounds = array<i64: 1, 128>}, {pipeline_mode = #tpu.pipeline_mode<synchronous>, transform_indices = @transform_6, window_bounds = array<i64: 64, 128>}]} {
    %c0 = arith.constant 0 : index
    %c0_0 = arith.constant 0 : index
    %0 = vector.load %arg2[%c0, %c0_0] : memref<64x32xf32, #tpu.memory_space<vmem>>, vector<64x32xf32>
    %1 = arith.truncf %0 : vector<64x32xf32> to vector<64x32xbf16>
    %c0_1 = arith.constant 0 : index
    %c0_2 = arith.constant 0 : index
    %2 = vector.load %arg3[%c0_1, %c0_2] : memref<32x32xf32, #tpu.memory_space<vmem>>, vector<32x32xf32>
    %3 = arith.truncf %2 : vector<32x32xf32> to vector<32x32xbf16>
    %cst = arith.constant dense<0.000000e+00> : vector<64x32xf32>
    %4 = tpu.matmul %1, %3, %cst {dimension_numbers = #tpu.dot_dimension_numbers<[1], [0], [0], [1], [0, 0, 1, 1], [], []>} : vector<64x32xbf16>, vector<32x32xbf16>, vector<64x32xf32> -> vector<64x32xf32>
    %c0_3 = arith.constant 0 : index
    %c0_4 = arith.constant 0 : index
    %5 = vector.load %arg4[%c0_3, %c0_4] : memref<1x32xf32, #tpu.memory_space<vmem>>, vector<1x32xf32>
    %6 = vector.broadcast %5 : vector<1x32xf32> to vector<64x32xf32>
    %7 = arith.addf %4, %6 : vector<64x32xf32>
    %cst_5 = arith.constant 0.000000e+00 : f32
    %8 = vector.broadcast %cst_5 : f32 to vector<64x32xf32>
    %9 = arith.maximumf %7, %8 : vector<64x32xf32>
    %10 = arith.truncf %9 : vector<64x32xf32> to vector<64x32xbf16>
    %c0_6 = arith.constant 0 : index
    %c0_7 = arith.constant 0 : index
    %11 = vector.load %arg5[%c0_6, %c0_7] : memref<32x128xf32, #tpu.memory_space<vmem>>, vector<32x128xf32>
    %12 = arith.truncf %11 : vector<32x128xf32> to vector<32x128xbf16>
    %cst_8 = arith.constant dense<0.000000e+00> : vector<64x128xf32>
    %13 = tpu.matmul %10, %12, %cst_8 {dimension_numbers = #tpu.dot_dimension_numbers<[1], [0], [0], [1], [0, 0, 1, 1], [], []>} : vector<64x32xbf16>, vector<32x128xbf16>, vector<64x128xf32> -> vector<64x128xf32>
    %c0_9 = arith.constant 0 : index
    %c0_10 = arith.constant 0 : index
    %14 = vector.load %arg6[%c0_9, %c0_10] : memref<1x128xf32, #tpu.memory_space<vmem>>, vector<1x128xf32>
    %15 = vector.broadcast %14 : vector<1x128xf32> to vector<64x128xf32>
    %16 = arith.addf %13, %15 : vector<64x128xf32>
    %c0_11 = arith.constant 0 : index
    %c0_12 = arith.constant 0 : index
    %17 = vector.load %arg1[%c0_11, %c0_12] : memref<64x64xbf16, #tpu.memory_space<vmem>>, vector<64x64xbf16>
    %cst_13 = arith.constant 1.000000e-01 : f32
    %18 = vector.broadcast %cst_13 : f32 to vector<64x128xf32>
    %19 = arith.mulf %18, %16 : vector<64x128xf32>
    %20 = arith.truncf %16 : vector<64x128xf32> to vector<64x128xbf16>
    %cst_14 = arith.constant dense<0.000000e+00> : vector<64x128xf32>
    %21 = tpu.matmul %17, %20, %cst_14 {dimension_numbers = #tpu.dot_dimension_numbers<[1], [0], [0], [1], [0, 0, 1, 1], [], []>} : vector<64x64xbf16>, vector<64x128xbf16>, vector<64x128xf32> -> vector<64x128xf32>
    %cst_15 = arith.constant 0.899999976 : f32
    %22 = vector.broadcast %cst_15 : f32 to vector<64x128xf32>
    %23 = arith.mulf %22, %21 : vector<64x128xf32>
    %24 = arith.addf %23, %19 : vector<64x128xf32>
    %25 = arith.truncf %24 : vector<64x128xf32> to vector<64x128xbf16>
    %cst_16 = arith.constant dense<0.000000e+00> : vector<64x128xf32>
    %26 = tpu.matmul %17, %25, %cst_16 {dimension_numbers = #tpu.dot_dimension_numbers<[1], [0], [0], [1], [0, 0, 1, 1], [], []>} : vector<64x64xbf16>, vector<64x128xbf16>, vector<64x128xf32> -> vector<64x128xf32>
    %cst_17 = arith.constant 0.899999976 : f32
    %27 = vector.broadcast %cst_17 : f32 to vector<64x128xf32>
    %28 = arith.mulf %27, %26 : vector<64x128xf32>
    %29 = arith.addf %28, %19 : vector<64x128xf32>
    %30 = arith.truncf %29 : vector<64x128xf32> to vector<64x128xbf16>
    %cst_18 = arith.constant dense<0.000000e+00> : vector<64x128xf32>
    %31 = tpu.matmul %17, %30, %cst_18 {dimension_numbers = #tpu.dot_dimension_numbers<[1], [0], [0], [1], [0, 0, 1, 1], [], []>} : vector<64x64xbf16>, vector<64x128xbf16>, vector<64x128xf32> -> vector<64x128xf32>
    %cst_19 = arith.constant 0.899999976 : f32
    %32 = vector.broadcast %cst_19 : f32 to vector<64x128xf32>
    %33 = arith.mulf %32, %31 : vector<64x128xf32>
    %34 = arith.addf %33, %19 : vector<64x128xf32>
    %35 = arith.truncf %34 : vector<64x128xf32> to vector<64x128xbf16>
    %cst_20 = arith.constant dense<0.000000e+00> : vector<64x128xf32>
    %36 = tpu.matmul %17, %35, %cst_20 {dimension_numbers = #tpu.dot_dimension_numbers<[1], [0], [0], [1], [0, 0, 1, 1], [], []>} : vector<64x64xbf16>, vector<64x128xbf16>, vector<64x128xf32> -> vector<64x128xf32>
    %cst_21 = arith.constant 0.899999976 : f32
    %37 = vector.broadcast %cst_21 : f32 to vector<64x128xf32>
    %38 = arith.mulf %37, %36 : vector<64x128xf32>
    %39 = arith.addf %38, %19 : vector<64x128xf32>
    %40 = arith.truncf %39 : vector<64x128xf32> to vector<64x128xbf16>
    %cst_22 = arith.constant dense<0.000000e+00> : vector<64x128xf32>
    %41 = tpu.matmul %17, %40, %cst_22 {dimension_numbers = #tpu.dot_dimension_numbers<[1], [0], [0], [1], [0, 0, 1, 1], [], []>} : vector<64x64xbf16>, vector<64x128xbf16>, vector<64x128xf32> -> vector<64x128xf32>
    %cst_23 = arith.constant 0.899999976 : f32
    %42 = vector.broadcast %cst_23 : f32 to vector<64x128xf32>
    %43 = arith.mulf %42, %41 : vector<64x128xf32>
    %44 = arith.addf %43, %19 : vector<64x128xf32>
    %45 = arith.truncf %44 : vector<64x128xf32> to vector<64x128xbf16>
    %cst_24 = arith.constant dense<0.000000e+00> : vector<64x128xf32>
    %46 = tpu.matmul %17, %45, %cst_24 {dimension_numbers = #tpu.dot_dimension_numbers<[1], [0], [0], [1], [0, 0, 1, 1], [], []>} : vector<64x64xbf16>, vector<64x128xbf16>, vector<64x128xf32> -> vector<64x128xf32>
    %cst_25 = arith.constant 0.899999976 : f32
    %47 = vector.broadcast %cst_25 : f32 to vector<64x128xf32>
    %48 = arith.mulf %47, %46 : vector<64x128xf32>
    %49 = arith.addf %48, %19 : vector<64x128xf32>
    %50 = arith.truncf %49 : vector<64x128xf32> to vector<64x128xbf16>
    %cst_26 = arith.constant dense<0.000000e+00> : vector<64x128xf32>
    %51 = tpu.matmul %17, %50, %cst_26 {dimension_numbers = #tpu.dot_dimension_numbers<[1], [0], [0], [1], [0, 0, 1, 1], [], []>} : vector<64x64xbf16>, vector<64x128xbf16>, vector<64x128xf32> -> vector<64x128xf32>
    %cst_27 = arith.constant 0.899999976 : f32
    %52 = vector.broadcast %cst_27 : f32 to vector<64x128xf32>
    %53 = arith.mulf %52, %51 : vector<64x128xf32>
    %54 = arith.addf %53, %19 : vector<64x128xf32>
    %55 = arith.truncf %54 : vector<64x128xf32> to vector<64x128xbf16>
    %cst_28 = arith.constant dense<0.000000e+00> : vector<64x128xf32>
    %56 = tpu.matmul %17, %55, %cst_28 {dimension_numbers = #tpu.dot_dimension_numbers<[1], [0], [0], [1], [0, 0, 1, 1], [], []>} : vector<64x64xbf16>, vector<64x128xbf16>, vector<64x128xf32> -> vector<64x128xf32>
    %cst_29 = arith.constant 0.899999976 : f32
    %57 = vector.broadcast %cst_29 : f32 to vector<64x128xf32>
    %58 = arith.mulf %57, %56 : vector<64x128xf32>
    %59 = arith.addf %58, %19 : vector<64x128xf32>
    %60 = arith.truncf %59 : vector<64x128xf32> to vector<64x128xbf16>
    %cst_30 = arith.constant dense<0.000000e+00> : vector<64x128xf32>
    %61 = tpu.matmul %17, %60, %cst_30 {dimension_numbers = #tpu.dot_dimension_numbers<[1], [0], [0], [1], [0, 0, 1, 1], [], []>} : vector<64x64xbf16>, vector<64x128xbf16>, vector<64x128xf32> -> vector<64x128xf32>
    %cst_31 = arith.constant 0.899999976 : f32
    %62 = vector.broadcast %cst_31 : f32 to vector<64x128xf32>
    %63 = arith.mulf %62, %61 : vector<64x128xf32>
    %64 = arith.addf %63, %19 : vector<64x128xf32>
    %65 = arith.truncf %64 : vector<64x128xf32> to vector<64x128xbf16>
    %cst_32 = arith.constant dense<0.000000e+00> : vector<64x128xf32>
    %66 = tpu.matmul %17, %65, %cst_32 {dimension_numbers = #tpu.dot_dimension_numbers<[1], [0], [0], [1], [0, 0, 1, 1], [], []>} : vector<64x64xbf16>, vector<64x128xbf16>, vector<64x128xf32> -> vector<64x128xf32>
    %cst_33 = arith.constant 0.899999976 : f32
    %67 = vector.broadcast %cst_33 : f32 to vector<64x128xf32>
    %68 = arith.mulf %67, %66 : vector<64x128xf32>
    %69 = arith.addf %68, %19 : vector<64x128xf32>
    %c0_34 = arith.constant 0 : index
    %c0_35 = arith.constant 0 : index
    %70 = vector.load %arg7[%c0_34, %c0_35] : memref<64x128xf32, #tpu.memory_space<vmem>>, vector<64x128xf32>
    tpu.vector_store %arg7[%c0_34, %c0_35], %69 {strides = array<i32>} : memref<64x128xf32, #tpu.memory_space<vmem>>, vector<64x128xf32>,
    return
  }
  func.func @transform_0(%arg0: i32) -> (i32, i32) {
    %c0_i32 = arith.constant 0 : i32
    %c0_i32_0 = arith.constant 0 : i32
    %c0_i32_1 = arith.constant 0 : i32
    return %c0_i32, %c0_i32_0 : i32, i32
  }
  func.func @transform_1(%arg0: i32) -> (i32, i32) {
    %c0_i32 = arith.constant 0 : i32
    %c0_i32_0 = arith.constant 0 : i32
    %c0_i32_1 = arith.constant 0 : i32
    return %c0_i32, %c0_i32_0 : i32, i32
  }
  func.func @transform_2(%arg0: i32) -> (i32, i32) {
    %c0_i32 = arith.constant 0 : i32
    %c0_i32_0 = arith.constant 0 : i32
    %c0_i32_1 = arith.constant 0 : i32
    return %c0_i32, %c0_i32_0 : i32, i32
  }
  func.func @transform_3(%arg0: i32) -> (i32, i32) {
    %c0_i32 = arith.constant 0 : i32
    %c0_i32_0 = arith.constant 0 : i32
    %c0_i32_1 = arith.constant 0 : i32
    return %c0_i32, %c0_i32_0 : i32, i32
  }
  func.func @transform_4(%arg0: i32) -> (i32, i32) {
    %c0_i32 = arith.constant 0 : i32
    %c0_i32_0 = arith.constant 0 : i32
    %c0_i32_1 = arith.constant 0 : i32
    return %c0_i32, %c0_i32_0 : i32, i32
  }
  func.func @transform_5(%arg0: i32) -> (i32, i32) {
    %c0_i32 = arith.constant 0 : i32
    %c0_i32_0 = arith.constant 0 : i32
    %c0_i32_1 = arith.constant 0 : i32
    return %c0_i32, %c0_i32_0 : i32, i32
  }
  func.func @transform_6(%arg0: i32) -> (i32, i32) {
    %c0_i32 = arith.constant 0 : i32
    %c0_i32_0 = arith.constant 0 : i32
    %c0_i32_1 = arith.constant 0 : i32
    return %c0_i32, %c0_i32_0 : i32, i32
  }
}

</mosaic_0001>

<llo_original>
// kernel: tpu_custom_call.1
$region0: #{tpu_custom_call.1}
  #allocation0 [shape = 'u32[]', space=smem, size = 0x4, offset = 0x4, fixed_abs, tag = 'smem constant byte address 0x4 - core index']
  #allocation1 [shape = 'u32[144,128]{1,0:T(1,128)}', space=vmem, size = 0x12000, scoped, tag = 'internal scratch']
  %s0 = inlined_call_operand.hbm [shape: bf16[64,64], index: 0, kind: input, shape index: {}]
  %s1 = inlined_call_operand.hbm [shape: f32[64,32], index: 1, kind: input, shape index: {}]
  %s2 = inlined_call_operand.hbm [shape: f32[32,32], index: 2, kind: input, shape index: {}]
  %s3 = inlined_call_operand.hbm [shape: f32[1,32], index: 3, kind: input, shape index: {}]
  %s4 = inlined_call_operand.hbm [shape: f32[32,128], index: 4, kind: input, shape index: {}]
  %s5 = inlined_call_operand.hbm [shape: f32[1,128], index: 5, kind: input, shape index: {}]
  %s6 = inlined_call_operand.hbm [shape: f32[64,128], index: 6, kind: output, shape index: {}]
  %s7 = sld [smem:[#allocation0]]
  $region58: #{tpu_custom_call.1} parent=0
    _
  %s9 = ssub.s32 1, %s7
  %s10 = scalar_select 0, %s9, %s7
  $region1: #{tpu_custom_call.1} parent=0
    #allocation2 [shape = 'u8[16384]{0}', space=vmem, size = 0x4000, scoped, tag = 'input window, operand 0, single buffered']
    #allocation3 [shape = 's32[1]{0}', space=sflag, size = 0x4, scoped, tag = 'scoped memory for tpu_custom_call.1']
    #allocation4 [shape = 's32[1]{0}', space=sflag, size = 0x4, scoped, tag = 'scoped memory for tpu_custom_call.1']
    #allocation5 [shape = 'u8[32768]{0}', space=vmem, size = 0x8000, scoped, tag = 'input window, operand 1, single buffered']
    #allocation6 [shape = 's32[1]{0}', space=sflag, size = 0x4, scoped, tag = 'scoped memory for tpu_custom_call.1']
    #allocation7 [shape = 'u8[16384]{0}', space=vmem, size = 0x4000, scoped, tag = 'input window, operand 2, single buffered']
    #allocation8 [shape = 'u8[512]{0}', space=vmem, size = 0x400, scoped, tag = 'input window, operand 3, single buffered']
    #allocation9 [shape = 's32[1]{0}', space=sflag, size = 0x4, scoped, tag = 'scoped memory for tpu_custom_call.1']
    #allocation10 [shape = 'u8[16384]{0}', space=vmem, size = 0x4000, scoped, tag = 'input window, operand 4, single buffered']
    #allocation11 [shape = 'u8[512]{0}', space=vmem, size = 0x400, scoped, tag = 'input window, operand 5, single buffered']
    #allocation12 [shape = 's32[1]{0}', space=sflag, size = 0x4, scoped, tag = 'scoped memory for tpu_custom_call.1']
    #allocation13 [shape = 'u8[32768]{0}', space=vmem, size = 0x8000, scoped, tag = 'output window, operand 0, single buffered']
    %11 = vsyncpa [#allocation3], 0
    %12 = vsyncpa [#allocation6], 0
    %13 = vsyncpa [#allocation9], 0
    %14 = vsyncpa [#allocation12], 0
    %15 = vsyncpa [#allocation4], 0
    // Predicated region
    $region2: #{tpu_custom_call.1} parent=1 // pred_check
      _
    $region3: #{tpu_custom_call.1} parent=1 // pred_check_branch
      %17 = sbr.rel (0) target = $region5
    $region4: #{tpu_custom_call.1} parent=1 // pred_region
      %s19 = ssub.s32 512, 512
      %20 = vsyncadd [#allocation3], %s19
      %s21 = sshll.u32 [#allocation2], 4
      %s22 = int_to_ptr.vmem [resolvable:$true] %s21
      %27 = dma.hbm_to_vmem [thread:$0]  %s0, 512, %s22, [#allocation3], 64, 64, 4
    $region5: #{tpu_custom_call.1} parent=1 // pred_fallthru
      _
    // Predicated region
    $region6: #{tpu_custom_call.1} parent=1 // pred_check
      _
    $region7: #{tpu_custom_call.1} parent=1 // pred_check_branch
      %29 = sbr.rel (0) target = $region9
    $region8: #{tpu_custom_call.1} parent=1 // pred_region
      %s31 = ssub.s32 1024, 1024
      %32 = vsyncadd [#allocation6], %s31
      %s33 = sshll.u32 [#allocation5], 4
      %s34 = int_to_ptr.vmem [resolvable:$true] %s33
      %39 = dma.hbm_to_vmem [thread:$0]  %s1, 1024, %s34, [#allocation6], 128, 128, 8
    $region9: #{tpu_custom_call.1} parent=1 // pred_fallthru
      _
    // Predicated region
    $region10: #{tpu_custom_call.1} parent=1 // pred_check
      _
    $region11: #{tpu_custom_call.1} parent=1 // pred_check_branch
      %41 = sbr.rel (0) target = $region13
    $region12: #{tpu_custom_call.1} parent=1 // pred_region
      %s43 = ssub.s32 512, 512
      %44 = vsyncadd [#allocation6], %s43
      %s45 = sshll.u32 [#allocation7], 4
      %s46 = int_to_ptr.vmem [resolvable:$true] %s45
      %51 = dma.hbm_to_vmem [thread:$0]  %s2, 512, %s46, [#allocation6], 128, 128, 8
    $region13: #{tpu_custom_call.1} parent=1 // pred_fallthru
      _
    // Predicated region
    $region14: #{tpu_custom_call.1} parent=1 // pred_check
      _
    $region15: #{tpu_custom_call.1} parent=1 // pred_check_branch
      %53 = sbr.rel (0) target = $region17
    $region16: #{tpu_custom_call.1} parent=1 // pred_region
      %s55 = ssub.s32 16, 16
      %56 = vsyncadd [#allocation9], %s55
      %s58 = sshll.u32 [#allocation8], 4
      %s59 = int_to_ptr.vmem [resolvable:$true] %s58
      %61 = dma.hbm_to_vmem [thread:$0]  %s3, 16, %s59, [#allocation9]
    $region17: #{tpu_custom_call.1} parent=1 // pred_fallthru
      _
    // Predicated region
    $region18: #{tpu_custom_call.1} parent=1 // pred_check
      _
    $region19: #{tpu_custom_call.1} parent=1 // pred_check_branch
      %63 = sbr.rel (0) target = $region21
    $region20: #{tpu_custom_call.1} parent=1 // pred_region
      %s65 = ssub.s32 512, 512
      %66 = vsyncadd [#allocation9], %s65
      %s67 = sshll.u32 [#allocation10], 4
      %s68 = int_to_ptr.vmem [resolvable:$true] %s67
      %73 = dma.hbm_to_vmem [thread:$0]  %s4, 512, %s68, [#allocation9], 128, 128, 8
    $region21: #{tpu_custom_call.1} parent=1 // pred_fallthru
      _
    // Predicated region
    $region22: #{tpu_custom_call.1} parent=1 // pred_check
      _
    $region23: #{tpu_custom_call.1} parent=1 // pred_check_branch
      %75 = sbr.rel (0) target = $region25
    $region24: #{tpu_custom_call.1} parent=1 // pred_region
      %s77 = ssub.s32 16, 16
      %78 = vsyncadd [#allocation12], %s77
      %s80 = sshll.u32 [#allocation11], 4
      %s81 = int_to_ptr.vmem [resolvable:$true] %s80
      %83 = dma.hbm_to_vmem [thread:$0]  %s5, 16, %s81, [#allocation12]
    $region25: #{tpu_custom_call.1} parent=1 // pred_fallthru
      _
    // Predicated region
    $region26: #{tpu_custom_call.1} parent=1 // pred_check
      _
    $region27: #{tpu_custom_call.1} parent=1 // pred_check_branch
      %85 = sbr.rel (0) target = $region29
    $region28: #{tpu_custom_call.1} parent=1 // pred_region
      %86 = dma.done [#allocation3], 512
    $region29: #{tpu_custom_call.1} parent=1 // pred_fallthru
      _
    // Predicated region
    $region30: #{tpu_custom_call.1} parent=1 // pred_check
      _
    $region31: #{tpu_custom_call.1} parent=1 // pred_check_branch
      %88 = sbr.rel (0) target = $region33
    $region32: #{tpu_custom_call.1} parent=1 // pred_region
      %89 = dma.done [#allocation6], 1024
    $region33: #{tpu_custom_call.1} parent=1 // pred_fallthru
      _
    // Predicated region
    $region34: #{tpu_custom_call.1} parent=1 // pred_check
      _
    $region35: #{tpu_custom_call.1} parent=1 // pred_check_branch
      %91 = sbr.rel (0) target = $region37
    $region36: #{tpu_custom_call.1} parent=1 // pred_region
      %92 = dma.done [#allocation6], 512
    $region37: #{tpu_custom_call.1} parent=1 // pred_fallthru
      _
    // Predicated region
    $region38: #{tpu_custom_call.1} parent=1 // pred_check
      _
    $region39: #{tpu_custom_call.1} parent=1 // pred_check_branch
      %94 = sbr.rel (0) target = $region41
    $region40: #{tpu_custom_call.1} parent=1 // pred_region
      %95 = dma.done [#allocation9], 16
    $region41: #{tpu_custom_call.1} parent=1 // pred_fallthru
      _
    // Predicated region
    $region42: #{tpu_custom_call.1} parent=1 // pred_check
      _
    $region43: #{tpu_custom_call.1} parent=1 // pred_check_branch
      %97 = sbr.rel (0) target = $region45
    $region44: #{tpu_custom_call.1} parent=1 // pred_region
      %98 = dma.done [#allocation9], 512
    $region45: #{tpu_custom_call.1} parent=1 // pred_fallthru
      _
    // Predicated region
    $region46: #{tpu_custom_call.1} parent=1 // pred_check
      _
    $region47: #{tpu_custom_call.1} parent=1 // pred_check_branch
      %100 = sbr.rel (0) target = $region49
    $region48: #{tpu_custom_call.1} parent=1 // pred_region
      %101 = dma.done [#allocation12], 16
    $region49: #{tpu_custom_call.1} parent=1 // pred_fallthru
      _
    %v103 = vld [vmem:[#allocation5] sm:$0xff]
    %v104 = vld [vmem:[#allocation5 + $0x8] sm:$0xff]
    %v105 = vld [vmem:[#allocation5 + $0x10] sm:$0xff]
    %v106 = vld [vmem:[#allocation5 + $0x18] sm:$0xff]
    %v107 = vld [vmem:[#allocation5 + $0x20] sm:$0xff]
    %v108 = vld [vmem:[#allocation5 + $0x28] sm:$0xff]
    %v109 = vld [vmem:[#allocation5 + $0x30] sm:$0xff]
    %v110 = vld [vmem:[#allocation5 + $0x38] sm:$0xff]
    %v111 = vpack.c.bf16 %v104, %v103
    %v112 = vpack.c.bf16 %v106, %v105
    %v113 = vpack.c.bf16 %v108, %v107
    %v114 = vpack.c.bf16 %v110, %v109
    %v115 = vld [vmem:[#allocation7] sm:$0xff]
    %v116 = vld [vmem:[#allocation7 + $0x8] sm:$0xff]
    %v117 = vld [vmem:[#allocation7 + $0x10] sm:$0xff]
    %v118 = vld [vmem:[#allocation7 + $0x18] sm:$0xff]
    %v119 = vpack.c.bf16 %v116, %v115
    %v120 = vpack.c.bf16 %v118, %v117
    %v121 = vld [vmem:[#allocation8] sm:$0x1]
    %v123 = vlaneseq
    %v124 = vshrl.u32 %v123, 7
    %v125 = vsub.s32 0, %v124
    %v126 = vrot.slane %v121, %v125
    %vm128 = vcmask 261120
    %v130 = vsel %vm128, %v111, 0
    %v133 = vsel %vm128, %v112, 0
    %v136 = vsel %vm128, %v113, 0
    %v139 = vsel %vm128, %v114, 0
    %141 = vmatprep.subr.bf16.mxu0 0
    %142 = vmatpush1.bf16.msra.mxu0 %v119
    %143 = vmatprep.subr.bf16.mxu0 0
    %144 = vmatpush1.bf16.msra.mxu0 %v120
    %145 = vmatprep.subr.bf16.mxu0 0
    %146 = vmatpush1.bf16.msra.mxu0 0
    %147 = vmatprep.subr.bf16.mxu0 0
    %148 = vmatpush1.bf16.msra.mxu0 0
    %149 = vmatprep.subr.bf16.mxu0 0
    %150 = vmatpush1.bf16.msra.mxu0 0
    %151 = vmatprep.subr.bf16.mxu0 0
    %152 = vmatpush1.bf16.msra.mxu0 0
    %153 = vmatprep.subr.bf16.mxu0 0
    %154 = vmatpush1.bf16.msra.mxu0 0
    %155 = vmatprep.subr.bf16.mxu0 0
    %156 = vmatpush1.bf16.msra.mxu0 0
    %157 = vmatprep.subr.bf16.mxu0 0
    %158 = vmatpush1.bf16.msra.mxu0 0
    %159 = vmatprep.subr.bf16.mxu0 0
    %160 = vmatpush1.bf16.msra.mxu0 0
    %161 = vmatprep.subr.bf16.mxu0 0
    %162 = vmatpush1.bf16.msra.mxu0 0
    %163 = vmatprep.subr.bf16.mxu0 0
    %164 = vmatpush1.bf16.msra.mxu0 0
    %165 = vmatprep.subr.bf16.mxu0 0
    %166 = vmatpush1.bf16.msra.mxu0 0
    %167 = vmatprep.subr.bf16.mxu0 0
    %168 = vmatpush1.bf16.msra.mxu0 0
    %169 = vmatprep.subr.bf16.mxu0 0
    %170 = vmatpush1.bf16.msra.mxu0 0
    %171 = vmatprep.subr.bf16.mxu0 0
    %172 = vmatpush1.bf16.msra.mxu0 0
    %173 = vmatprep.mubr.bf16.mxu0 0
    %174 = vmatmul.mubr.bf16.gmra.mrb[0].mxu0 %v130
    %v175 = vpop.f32.mrb[0].mxu0
    %v176 = vadd.f32 %v126, %v175
    %v177 = vpop.f32.mrb[0].mxu0
    %v178 = vpop.f32.mrb[0].mxu0
    %v179 = vadd.f32 %v126, %v178
    %v180 = vpop.f32.mrb[0].mxu0
    %181 = vmatprep.mubr.bf16.mxu0 0
    %182 = vmatmul.mubr.bf16.gmra.mrb[0].mxu0 %v133
    %v183 = vpop.f32.mrb[0].mxu0
    %v184 = vadd.f32 %v126, %v183
    %v185 = vpop.f32.mrb[0].mxu0
    %v186 = vpop.f32.mrb[0].mxu0
    %v187 = vadd.f32 %v126, %v186
    %v188 = vpop.f32.mrb[0].mxu0
    %189 = vmatprep.mubr.bf16.mxu0 0
    %190 = vmatmul.mubr.bf16.gmra.mrb[0].mxu0 %v136
    %v191 = vpop.f32.mrb[0].mxu0
    %v192 = vadd.f32 %v126, %v191
    %v193 = vpop.f32.mrb[0].mxu0
    %v194 = vpop.f32.mrb[0].mxu0
    %v195 = vadd.f32 %v126, %v194
    %v196 = vpop.f32.mrb[0].mxu0
    %197 = vmatprep.mubr.bf16.mxu0 0
    %198 = vmatmul.mubr.bf16.gmra.mrb[0].mxu0 %v139
    %v199 = vpop.f32.mrb[0].mxu0
    %v200 = vadd.f32 %v126, %v199
    %v201 = vpop.f32.mrb[0].mxu0
    %v202 = vpop.f32.mrb[0].mxu0
    %v203 = vadd.f32 %v126, %v202
    %v204 = vpop.f32.mrb[0].mxu0
    %205 = vdwg.mxu0
    %v206 = vmax.f32 %v176, 0.0
    %v207 = vmax.f32 %v179, 0.0
    %v208 = vmax.f32 %v184, 0.0
    %v209 = vmax.f32 %v187, 0.0
    %v210 = vmax.f32 %v192, 0.0
    %v211 = vmax.f32 %v195, 0.0
    %v212 = vmax.f32 %v200, 0.0
    %v213 = vmax.f32 %v203, 0.0
    %v214 = vpack.c.bf16 %v207, %v206
    %v215 = vpack.c.bf16 %v209, %v208
    %v216 = vpack.c.bf16 %v211, %v210
    %v217 = vpack.c.bf16 %v213, %v212
    %v218 = vld [vmem:[#allocation10] sm:$0xff]
    %v219 = vld [vmem:[#allocation10 + $0x8] sm:$0xff]
    %v220 = vld [vmem:[#allocation10 + $0x10] sm:$0xff]
    %v221 = vld [vmem:[#allocation10 + $0x18] sm:$0xff]
    %v222 = vpack.c.bf16 %v219, %v218
    %v223 = vpack.c.bf16 %v221, %v220
    %v224 = vld [vmem:[#allocation11] sm:$0x1]
    %v226 = vlaneseq
    %v227 = vshrl.u32 %v226, 7
    %v228 = vsub.s32 0, %v227
    %v229 = vrot.slane %v224, %v228
    %v232 = vsel %vm128, %v214, 0
    %v235 = vsel %vm128, %v215, 0
    %v238 = vsel %vm128, %v216, 0
    %v241 = vsel %vm128, %v217, 0
    %243 = vmatprep.subr.bf16.mxu0 0
    %244 = vmatpush1.bf16.msra.mxu0 %v222
    %245 = vmatprep.subr.bf16.mxu0 0
    %246 = vmatpush1.bf16.msra.mxu0 %v223
    %247 = vmatprep.subr.bf16.mxu0 0
    %248 = vmatpush1.bf16.msra.mxu0 0
    %249 = vmatprep.subr.bf16.mxu0 0
    %250 = vmatpush1.bf16.msra.mxu0 0
    %251 = vmatprep.subr.bf16.mxu0 0
    %252 = vmatpush1.bf16.msra.mxu0 0
    %253 = vmatprep.subr.bf16.mxu0 0
    %254 = vmatpush1.bf16.msra.mxu0 0
    %255 = vmatprep.subr.bf16.mxu0 0
    %256 = vmatpush1.bf16.msra.mxu0 0
    %257 = vmatprep.subr.bf16.mxu0 0
    %258 = vmatpush1.bf16.msra.mxu0 0
    %259 = vmatprep.subr.bf16.mxu0 0
    %260 = vmatpush1.bf16.msra.mxu0 0
    %261 = vmatprep.subr.bf16.mxu0 0
    %262 = vmatpush1.bf16.msra.mxu0 0
    %263 = vmatprep.subr.bf16.mxu0 0
    %264 = vmatpush1.bf16.msra.mxu0 0
    %265 = vmatprep.subr.bf16.mxu0 0
    %266 = vmatpush1.bf16.msra.mxu0 0
    %267 = vmatprep.subr.bf16.mxu0 0
    %268 = vmatpush1.bf16.msra.mxu0 0
    %269 = vmatprep.subr.bf16.mxu0 0
    %270 = vmatpush1.bf16.msra.mxu0 0
    %271 = vmatprep.subr.bf16.mxu0 0
    %272 = vmatpush1.bf16.msra.mxu0 0
    %273 = vmatprep.subr.bf16.mxu0 0
    %274 = vmatpush1.bf16.msra.mxu0 0
    %275 = vmatprep.mubr.bf16.mxu0 0
    %276 = vmatmul.mubr.bf16.gmra.mrb[0].mxu0 %v232
    %v277 = vpop.f32.mrb[0].mxu0
    %v278 = vadd.f32 %v229, %v277
    %v279 = vpop.f32.mrb[0].mxu0
    %v280 = vpop.f32.mrb[0].mxu0
    %v281 = vadd.f32 %v229, %v280
    %v282 = vpop.f32.mrb[0].mxu0
    %283 = vmatprep.mubr.bf16.mxu0 0
    %284 = vmatmul.mubr.bf16.gmra.mrb[0].mxu0 %v235
    %v285 = vpop.f32.mrb[0].mxu0
    %v286 = vadd.f32 %v229, %v285
    %v287 = vpop.f32.mrb[0].mxu0
    %v288 = vpop.f32.mrb[0].mxu0
    %v289 = vadd.f32 %v229, %v288
    %v290 = vpop.f32.mrb[0].mxu0
    %291 = vmatprep.mubr.bf16.mxu0 0
    %292 = vmatmul.mubr.bf16.gmra.mrb[0].mxu0 %v238
    %v293 = vpop.f32.mrb[0].mxu0
    %v294 = vadd.f32 %v229, %v293
    %v295 = vpop.f32.mrb[0].mxu0
    %v296 = vpop.f32.mrb[0].mxu0
    %v297 = vadd.f32 %v229, %v296
    %v298 = vpop.f32.mrb[0].mxu0
    %299 = vmatprep.mubr.bf16.mxu0 0
    %300 = vmatmul.mubr.bf16.gmra.mrb[0].mxu0 %v241
    %v301 = vpop.f32.mrb[0].mxu0
    %v302 = vadd.f32 %v229, %v301
    %v303 = vpop.f32.mrb[0].mxu0
    %v304 = vpop.f32.mrb[0].mxu0
    %v305 = vadd.f32 %v229, %v304
    %v306 = vpop.f32.mrb[0].mxu0
    %307 = vdwg.mxu0
    %v308 = vld [vmem:[#allocation2] sm:$0xf]
    %v309 = vld [vmem:[#allocation2 + $0x4] sm:$0xf]
    %v310 = vld [vmem:[#allocation2 + $0x8] sm:$0xf]
    %v311 = vld [vmem:[#allocation2 + $0xc] sm:$0xf]
    %v312 = vld [vmem:[#allocation2 + $0x10] sm:$0xf]
    %v313 = vld [vmem:[#allocation2 + $0x14] sm:$0xf]
    %v314 = vld [vmem:[#allocation2 + $0x18] sm:$0xf]
    %v315 = vld [vmem:[#allocation2 + $0x1c] sm:$0xf]
    %v316 = vmul.f32 %v278, 0.1
    %v317 = vmul.f32 %v281, 0.1
    %v318 = vmul.f32 %v286, 0.1
    %v319 = vmul.f32 %v289, 0.1
    %v320 = vmul.f32 %v294, 0.1
    %v321 = vmul.f32 %v297, 0.1
    %v322 = vmul.f32 %v302, 0.1
    %v323 = vmul.f32 %v305, 0.1
    %v324 = vpack.c.bf16 %v281, %v278
    %v325 = vpack.c.bf16 %v289, %v286
    %v326 = vpack.c.bf16 %v297, %v294
    %v327 = vpack.c.bf16 %v305, %v302
    %v336 = vunpack.c.l.b16 %v308
    %v337 = vunpack.c.l.b16 %v309
    %v338 = vunpack.c.l.b16 %v310
    %v339 = vunpack.c.l.b16 %v311
    %v340 = vunpack.c.l.b16 %v312
    %v341 = vunpack.c.l.b16 %v313
    %v342 = vunpack.c.l.b16 %v314
    %v343 = vunpack.c.l.b16 %v315
    %v344 = vpack.c.b16 %v337, %v336
    %v345 = vpack.c.b16 %v339, %v338
    %v346 = vpack.c.b16 %v341, %v340
    %v347 = vpack.c.b16 %v343, %v342
    %vm348 = vcmask 523264
    %v350 = vsel %vm348, %v344, 0
    %v353 = vsel %vm348, %v345, 0
    %v356 = vsel %vm348, %v346, 0
    %v359 = vsel %vm348, %v347, 0
    %361 = vmatprep.subr.bf16.mxu0 0
    %362 = vmatpush1.bf16.msra.mxu0 %v324
    %363 = vmatprep.subr.bf16.mxu0 0
    %364 = vmatpush1.bf16.msra.mxu0 %v325
    %365 = vmatprep.subr.bf16.mxu0 0
    %366 = vmatpush1.bf16.msra.mxu0 %v326
    %367 = vmatprep.subr.bf16.mxu0 0
    %368 = vmatpush1.bf16.msra.mxu0 %v327
    %369 = vmatprep.subr.bf16.mxu0 0
    %370 = vmatpush1.bf16.msra.mxu0 0
    %371 = vmatprep.subr.bf16.mxu0 0
    %372 = vmatpush1.bf16.msra.mxu0 0
    %373 = vmatprep.subr.bf16.mxu0 0
    %374 = vmatpush1.bf16.msra.mxu0 0
    %375 = vmatprep.subr.bf16.mxu0 0
    %376 = vmatpush1.bf16.msra.mxu0 0
    %377 = vmatprep.subr.bf16.mxu0 0
    %378 = vmatpush1.bf16.msra.mxu0 0
    %379 = vmatprep.subr.bf16.mxu0 0
    %380 = vmatpush1.bf16.msra.mxu0 0
    %381 = vmatprep.subr.bf16.mxu0 0
    %382 = vmatpush1.bf16.msra.mxu0 0
    %383 = vmatprep.subr.bf16.mxu0 0
    %384 = vmatpush1.bf16.msra.mxu0 0
    %385 = vmatprep.subr.bf16.mxu0 0
    %386 = vmatpush1.bf16.msra.mxu0 0
    %387 = vmatprep.subr.bf16.mxu0 0
    %388 = vmatpush1.bf16.msra.mxu0 0
    %389 = vmatprep.subr.bf16.mxu0 0
    %390 = vmatpush1.bf16.msra.mxu0 0
    %391 = vmatprep.subr.bf16.mxu0 0
    %392 = vmatpush1.bf16.msra.mxu0 0
    %393 = vmatprep.mubr.bf16.mxu0 0
    %394 = vmatmul.mubr.bf16.gmra.mrb[0].mxu0 %v350
    %v395 = vpop.f32.mrb[0].mxu0
    %v396 = vadd.f32 0.0, %v395
    %v397 = vpop.f32.mrb[0].mxu0
    %v398 = vpop.f32.mrb[0].mxu0
    %v399 = vadd.f32 0.0, %v398
    %v400 = vpop.f32.mrb[0].mxu0
    %401 = vmatprep.mubr.bf16.mxu0 0
    %402 = vmatmul.mubr.bf16.gmra.mrb[0].mxu0 %v353
    %v403 = vpop.f32.mrb[0].mxu0
    %v404 = vadd.f32 0.0, %v403
    %v405 = vpop.f32.mrb[0].mxu0
    %v406 = vpop.f32.mrb[0].mxu0
    %v407 = vadd.f32 0.0, %v406
    %v408 = vpop.f32.mrb[0].mxu0
    %409 = vmatprep.mubr.bf16.mxu0 0
    %410 = vmatmul.mubr.bf16.gmra.mrb[0].mxu0 %v356
    %v411 = vpop.f32.mrb[0].mxu0
    %v412 = vadd.f32 0.0, %v411
    %v413 = vpop.f32.mrb[0].mxu0
    %v414 = vpop.f32.mrb[0].mxu0
    %v415 = vadd.f32 0.0, %v414
    %v416 = vpop.f32.mrb[0].mxu0
    %417 = vmatprep.mubr.bf16.mxu0 0
    %418 = vmatmul.mubr.bf16.gmra.mrb[0].mxu0 %v359
    %v419 = vpop.f32.mrb[0].mxu0
    %v420 = vadd.f32 0.0, %v419
    %v421 = vpop.f32.mrb[0].mxu0
    %v422 = vpop.f32.mrb[0].mxu0
    %v423 = vadd.f32 0.0, %v422
    %v424 = vpop.f32.mrb[0].mxu0
    %425 = vdwg.mxu0
    %v426 = vmul.f32 %v396, 0.9
    %v427 = vmul.f32 %v399, 0.9
    %v428 = vmul.f32 %v404, 0.9
    %v429 = vmul.f32 %v407, 0.9
    %v430 = vmul.f32 %v412, 0.9
    %v431 = vmul.f32 %v415, 0.9
    %v432 = vmul.f32 %v420, 0.9
    %v433 = vmul.f32 %v423, 0.9
    %v434 = vadd.f32 %v426, %v316
    %v435 = vadd.f32 %v427, %v317
    %v436 = vadd.f32 %v428, %v318
    %v437 = vadd.f32 %v429, %v319
    %v438 = vadd.f32 %v430, %v320
    %v439 = vadd.f32 %v431, %v321
    %v440 = vadd.f32 %v432, %v322
    %v441 = vadd.f32 %v433, %v323
    %v442 = vpack.c.bf16 %v435, %v434
    %v443 = vpack.c.bf16 %v437, %v436
    %v444 = vpack.c.bf16 %v439, %v438
    %v445 = vpack.c.bf16 %v441, %v440
    %446 = vmatprep.subr.bf16.mxu0 0
    %447 = vmatpush1.bf16.msra.mxu0 %v442
    %448 = vmatprep.subr.bf16.mxu0 0
    %449 = vmatpush1.bf16.msra.mxu0 %v443
    %450 = vmatprep.subr.bf16.mxu0 0
    %451 = vmatpush1.bf16.msra.mxu0 %v444
    %452 = vmatprep.subr.bf16.mxu0 0
    %453 = vmatpush1.bf16.msra.mxu0 %v445
    %454 = vmatprep.subr.bf16.mxu0 0
    %455 = vmatpush1.bf16.msra.mxu0 0
    %456 = vmatprep.subr.bf16.mxu0 0
    %457 = vmatpush1.bf16.msra.mxu0 0
    %458 = vmatprep.subr.bf16.mxu0 0
    %459 = vmatpush1.bf16.msra.mxu0 0
    %460 = vmatprep.subr.bf16.mxu0 0
    %461 = vmatpush1.bf16.msra.mxu0 0
    %462 = vmatprep.subr.bf16.mxu0 0
    %463 = vmatpush1.bf16.msra.mxu0 0
    %464 = vmatprep.subr.bf16.mxu0 0
    %465 = vmatpush1.bf16.msra.mxu0 0
    %466 = vmatprep.subr.bf16.mxu0 0
    %467 = vmatpush1.bf16.msra.mxu0 0
    %468 = vmatprep.subr.bf16.mxu0 0
    %469 = vmatpush1.bf16.msra.mxu0 0
    %470 = vmatprep.subr.bf16.mxu0 0
    %471 = vmatpush1.bf16.msra.mxu0 0
    %472 = vmatprep.subr.bf16.mxu0 0
    %473 = vmatpush1.bf16.msra.mxu0 0
    %474 = vmatprep.subr.bf16.mxu0 0
    %475 = vmatpush1.bf16.msra.mxu0 0
    %476 = vmatprep.subr.bf16.mxu0 0
    %477 = vmatpush1.bf16.msra.mxu0 0
    %478 = vmatprep.mubr.bf16.mxu0 0
    %479 = vmatmul.mubr.bf16.gmra.mrb[0].mxu0 %v350
    %v480 = vpop.f32.mrb[0].mxu0
    %v481 = vadd.f32 0.0, %v480
    %v482 = vpop.f32.mrb[0].mxu0
    %v483 = vpop.f32.mrb[0].mxu0
    %v484 = vadd.f32 0.0, %v483
    %v485 = vpop.f32.mrb[0].mxu0
    %486 = vmatprep.mubr.bf16.mxu0 0
    %487 = vmatmul.mubr.bf16.gmra.mrb[0].mxu0 %v353
    %v488 = vpop.f32.mrb[0].mxu0
    %v489 = vadd.f32 0.0, %v488
    %v490 = vpop.f32.mrb[0].mxu0
    %v491 = vpop.f32.mrb[0].mxu0
    %v492 = vadd.f32 0.0, %v491
    %v493 = vpop.f32.mrb[0].mxu0
    %494 = vmatprep.mubr.bf16.mxu0 0
    %495 = vmatmul.mubr.bf16.gmra.mrb[0].mxu0 %v356
    %v496 = vpop.f32.mrb[0].mxu0
    %v497 = vadd.f32 0.0, %v496
    %v498 = vpop.f32.mrb[0].mxu0
    %v499 = vpop.f32.mrb[0].mxu0
    %v500 = vadd.f32 0.0, %v499
    %v501 = vpop.f32.mrb[0].mxu0
    %502 = vmatprep.mubr.bf16.mxu0 0
    %503 = vmatmul.mubr.bf16.gmra.mrb[0].mxu0 %v359
    %v504 = vpop.f32.mrb[0].mxu0
    %v505 = vadd.f32 0.0, %v504
    %v506 = vpop.f32.mrb[0].mxu0
    %v507 = vpop.f32.mrb[0].mxu0
    %v508 = vadd.f32 0.0, %v507
    %v509 = vpop.f32.mrb[0].mxu0
    %510 = vdwg.mxu0
    %v511 = vmul.f32 %v481, 0.9
    %v512 = vmul.f32 %v484, 0.9
    %v513 = vmul.f32 %v489, 0.9
    %v514 = vmul.f32 %v492, 0.9
    %v515 = vmul.f32 %v497, 0.9
    %v516 = vmul.f32 %v500, 0.9
    %v517 = vmul.f32 %v505, 0.9
    %v518 = vmul.f32 %v508, 0.9
    %v519 = vadd.f32 %v511, %v316
    %v520 = vadd.f32 %v512, %v317
    %v521 = vadd.f32 %v513, %v318
    %v522 = vadd.f32 %v514, %v319
    %v523 = vadd.f32 %v515, %v320
    %v524 = vadd.f32 %v516, %v321
    %v525 = vadd.f32 %v517, %v322
    %v526 = vadd.f32 %v518, %v323
    %v527 = vpack.c.bf16 %v520, %v519
    %v528 = vpack.c.bf16 %v522, %v521
    %v529 = vpack.c.bf16 %v524, %v523
    %v530 = vpack.c.bf16 %v526, %v525
    %531 = vmatprep.subr.bf16.mxu0 0
    %532 = vmatpush1.bf16.msra.mxu0 %v527
    %533 = vmatprep.subr.bf16.mxu0 0
    %534 = vmatpush1.bf16.msra.mxu0 %v528
    %535 = vmatprep.subr.bf16.mxu0 0
    %536 = vmatpush1.bf16.msra.mxu0 %v529
    %537 = vmatprep.subr.bf16.mxu0 0
    %538 = vmatpush1.bf16.msra.mxu0 %v530
    %539 = vmatprep.subr.bf16.mxu0 0
    %540 = vmatpush1.bf16.msra.mxu0 0
    %541 = vmatprep.subr.bf16.mxu0 0
    %542 = vmatpush1.bf16.msra.mxu0 0
    %543 = vmatprep.subr.bf16.mxu0 0
    %544 = vmatpush1.bf16.msra.mxu0 0
    %545 = vmatprep.subr.bf16.mxu0 0
    %546 = vmatpush1.bf16.msra.mxu0 0
    %547 = vmatprep.subr.bf16.mxu0 0
    %548 = vmatpush1.bf16.msra.mxu0 0
    %549 = vmatprep.subr.bf16.mxu0 0
    %550 = vmatpush1.bf16.msra.mxu0 0
    %551 = vmatprep.subr.bf16.mxu0 0
    %552 = vmatpush1.bf16.msra.mxu0 0
    %553 = vmatprep.subr.bf16.mxu0 0
    %554 = vmatpush1.bf16.msra.mxu0 0
    %555 = vmatprep.subr.bf16.mxu0 0
    %556 = vmatpush1.bf16.msra.mxu0 0
    %557 = vmatprep.subr.bf16.mxu0 0
    %558 = vmatpush1.bf16.msra.mxu0 0
    %559 = vmatprep.subr.bf16.mxu0 0
    %560 = vmatpush1.bf16.msra.mxu0 0
    %561 = vmatprep.subr.bf16.mxu0 0
    %562 = vmatpush1.bf16.msra.mxu0 0
    %563 = vmatprep.mubr.bf16.mxu0 0
    %564 = vmatmul.mubr.bf16.gmra.mrb[0].mxu0 %v350
    %v565 = vpop.f32.mrb[0].mxu0
    %v566 = vadd.f32 0.0, %v565
    %v567 = vpop.f32.mrb[0].mxu0
    %v568 = vpop.f32.mrb[0].mxu0
    %v569 = vadd.f32 0.0, %v568
    %v570 = vpop.f32.mrb[0].mxu0
    %571 = vmatprep.mubr.bf16.mxu0 0
    %572 = vmatmul.mubr.bf16.gmra.mrb[0].mxu0 %v353
    %v573 = vpop.f32.mrb[0].mxu0
    %v574 = vadd.f32 0.0, %v573
    %v575 = vpop.f32.mrb[0].mxu0
    %v576 = vpop.f32.mrb[0].mxu0
    %v577 = vadd.f32 0.0, %v576
    %v578 = vpop.f32.mrb[0].mxu0
    %579 = vmatprep.mubr.bf16.mxu0 0
    %580 = vmatmul.mubr.bf16.gmra.mrb[0].mxu0 %v356
    %v581 = vpop.f32.mrb[0].mxu0
    %v582 = vadd.f32 0.0, %v581
    %v583 = vpop.f32.mrb[0].mxu0
    %v584 = vpop.f32.mrb[0].mxu0
    %v585 = vadd.f32 0.0, %v584
    %v586 = vpop.f32.mrb[0].mxu0
    %587 = vmatprep.mubr.bf16.mxu0 0
    %588 = vmatmul.mubr.bf16.gmra.mrb[0].mxu0 %v359
    %v589 = vpop.f32.mrb[0].mxu0
    %v590 = vadd.f32 0.0, %v589
    %v591 = vpop.f32.mrb[0].mxu0
    %v592 = vpop.f32.mrb[0].mxu0
    %v593 = vadd.f32 0.0, %v592
    %v594 = vpop.f32.mrb[0].mxu0
    %595 = vdwg.mxu0
    %v596 = vmul.f32 %v566, 0.9
    %v597 = vmul.f32 %v569, 0.9
    %v598 = vmul.f32 %v574, 0.9
    %v599 = vmul.f32 %v577, 0.9
    %v600 = vmul.f32 %v582, 0.9
    %v601 = vmul.f32 %v585, 0.9
    %v602 = vmul.f32 %v590, 0.9
    %v603 = vmul.f32 %v593, 0.9
    %v604 = vadd.f32 %v596, %v316
    %v605 = vadd.f32 %v597, %v317
    %v606 = vadd.f32 %v598, %v318
    %v607 = vadd.f32 %v599, %v319
    %v608 = vadd.f32 %v600, %v320
    %v609 = vadd.f32 %v601, %v321
    %v610 = vadd.f32 %v602, %v322
    %v611 = vadd.f32 %v603, %v323
    %v612 = vpack.c.bf16 %v605, %v604
    %v613 = vpack.c.bf16 %v607, %v606
    %v614 = vpack.c.bf16 %v609, %v608
    %v615 = vpack.c.bf16 %v611, %v610
    %616 = vmatprep.subr.bf16.mxu0 0
    %617 = vmatpush1.bf16.msra.mxu0 %v612
    %618 = vmatprep.subr.bf16.mxu0 0
    %619 = vmatpush1.bf16.msra.mxu0 %v613
    %620 = vmatprep.subr.bf16.mxu0 0
    %621 = vmatpush1.bf16.msra.mxu0 %v614
    %622 = vmatprep.subr.bf16.mxu0 0
    %623 = vmatpush1.bf16.msra.mxu0 %v615
    %624 = vmatprep.subr.bf16.mxu0 0
    %625 = vmatpush1.bf16.msra.mxu0 0
    %626 = vmatprep.subr.bf16.mxu0 0
    %627 = vmatpush1.bf16.msra.mxu0 0
    %628 = vmatprep.subr.bf16.mxu0 0
    %629 = vmatpush1.bf16.msra.mxu0 0
    %630 = vmatprep.subr.bf16.mxu0 0
    %631 = vmatpush1.bf16.msra.mxu0 0
    %632 = vmatprep.subr.bf16.mxu0 0
    %633 = vmatpush1.bf16.msra.mxu0 0
    %634 = vmatprep.subr.bf16.mxu0 0
    %635 = vmatpush1.bf16.msra.mxu0 0
    %636 = vmatprep.subr.bf16.mxu0 0
    %637 = vmatpush1.bf16.msra.mxu0 0
    %638 = vmatprep.subr.bf16.mxu0 0
    %639 = vmatpush1.bf16.msra.mxu0 0
    %640 = vmatprep.subr.bf16.mxu0 0
    %641 = vmatpush1.bf16.msra.mxu0 0
    %642 = vmatprep.subr.bf16.mxu0 0
    %643 = vmatpush1.bf16.msra.mxu0 0
    %644 = vmatprep.subr.bf16.mxu0 0
    %645 = vmatpush1.bf16.msra.mxu0 0
    %646 = vmatprep.subr.bf16.mxu0 0
    %647 = vmatpush1.bf16.msra.mxu0 0
    %648 = vmatprep.mubr.bf16.mxu0 0
    %649 = vmatmul.mubr.bf16.gmra.mrb[0].mxu0 %v350
    %v650 = vpop.f32.mrb[0].mxu0
    %v651 = vadd.f32 0.0, %v650
    %v652 = vpop.f32.mrb[0].mxu0
    %v653 = vpop.f32.mrb[0].mxu0
    %v654 = vadd.f32 0.0, %v653
    %v655 = vpop.f32.mrb[0].mxu0
    %656 = vmatprep.mubr.bf16.mxu0 0
    %657 = vmatmul.mubr.bf16.gmra.mrb[0].mxu0 %v353
    %v658 = vpop.f32.mrb[0].mxu0
    %v659 = vadd.f32 0.0, %v658
    %v660 = vpop.f32.mrb[0].mxu0
    %v661 = vpop.f32.mrb[0].mxu0
    %v662 = vadd.f32 0.0, %v661
    %v663 = vpop.f32.mrb[0].mxu0
    %664 = vmatprep.mubr.bf16.mxu0 0
    %665 = vmatmul.mubr.bf16.gmra.mrb[0].mxu0 %v356
    %v666 = vpop.f32.mrb[0].mxu0
    %v667 = vadd.f32 0.0, %v666
    %v668 = vpop.f32.mrb[0].mxu0
    %v669 = vpop.f32.mrb[0].mxu0
    %v670 = vadd.f32 0.0, %v669
    %v671 = vpop.f32.mrb[0].mxu0
    %672 = vmatprep.mubr.bf16.mxu0 0
    %673 = vmatmul.mubr.bf16.gmra.mrb[0].mxu0 %v359
    %v674 = vpop.f32.mrb[0].mxu0
    %v675 = vadd.f32 0.0, %v674
    %v676 = vpop.f32.mrb[0].mxu0
    %v677 = vpop.f32.mrb[0].mxu0
    %v678 = vadd.f32 0.0, %v677
    %v679 = vpop.f32.mrb[0].mxu0
    %680 = vdwg.mxu0
    %v681 = vmul.f32 %v651, 0.9
    %v682 = vmul.f32 %v654, 0.9
    %v683 = vmul.f32 %v659, 0.9
    %v684 = vmul.f32 %v662, 0.9
    %v685 = vmul.f32 %v667, 0.9
    %v686 = vmul.f32 %v670, 0.9
    %v687 = vmul.f32 %v675, 0.9
    %v688 = vmul.f32 %v678, 0.9
    %v689 = vadd.f32 %v681, %v316
    %v690 = vadd.f32 %v682, %v317
    %v691 = vadd.f32 %v683, %v318
    %v692 = vadd.f32 %v684, %v319
    %v693 = vadd.f32 %v685, %v320
    %v694 = vadd.f32 %v686, %v321
    %v695 = vadd.f32 %v687, %v322
    %v696 = vadd.f32 %v688, %v323
    %v697 = vpack.c.bf16 %v690, %v689
    %v698 = vpack.c.bf16 %v692, %v691
    %v699 = vpack.c.bf16 %v694, %v693
    %v700 = vpack.c.bf16 %v696, %v695
    %701 = vmatprep.subr.bf16.mxu0 0
    %702 = vmatpush1.bf16.msra.mxu0 %v697
    %703 = vmatprep.subr.bf16.mxu0 0
    %704 = vmatpush1.bf16.msra.mxu0 %v698
    %705 = vmatprep.subr.bf16.mxu0 0
    %706 = vmatpush1.bf16.msra.mxu0 %v699
    %707 = vmatprep.subr.bf16.mxu0 0
    %708 = vmatpush1.bf16.msra.mxu0 %v700
    %709 = vmatprep.subr.bf16.mxu0 0
    %710 = vmatpush1.bf16.msra.mxu0 0
    %711 = vmatprep.subr.bf16.mxu0 0
    %712 = vmatpush1.bf16.msra.mxu0 0
    %713 = vmatprep.subr.bf16.mxu0 0
    %714 = vmatpush1.bf16.msra.mxu0 0
    %715 = vmatprep.subr.bf16.mxu0 0
    %716 = vmatpush1.bf16.msra.mxu0 0
    %717 = vmatprep.subr.bf16.mxu0 0
    %718 = vmatpush1.bf16.msra.mxu0 0
    %719 = vmatprep.subr.bf16.mxu0 0
    %720 = vmatpush1.bf16.msra.mxu0 0
    %721 = vmatprep.subr.bf16.mxu0 0
    %722 = vmatpush1.bf16.msra.mxu0 0
    %723 = vmatprep.subr.bf16.mxu0 0
    %724 = vmatpush1.bf16.msra.mxu0 0
    %725 = vmatprep.subr.bf16.mxu0 0
    %726 = vmatpush1.bf16.msra.mxu0 0
    %727 = vmatprep.subr.bf16.mxu0 0
    %728 = vmatpush1.bf16.msra.mxu0 0
    %729 = vmatprep.subr.bf16.mxu0 0
    %730 = vmatpush1.bf16.msra.mxu0 0
    %731 = vmatprep.subr.bf16.mxu0 0
    %732 = vmatpush1.bf16.msra.mxu0 0
    %733 = vmatprep.mubr.bf16.mxu0 0
    %734 = vmatmul.mubr.bf16.gmra.mrb[0].mxu0 %v350
    %v735 = vpop.f32.mrb[0].mxu0
    %v736 = vadd.f32 0.0, %v735
    %v737 = vpop.f32.mrb[0].mxu0
    %v738 = vpop.f32.mrb[0].mxu0
    %v739 = vadd.f32 0.0, %v738
    %v740 = vpop.f32.mrb[0].mxu0
    %741 = vmatprep.mubr.bf16.mxu0 0
    %742 = vmatmul.mubr.bf16.gmra.mrb[0].mxu0 %v353
    %v743 = vpop.f32.mrb[0].mxu0
    %v744 = vadd.f32 0.0, %v743
    %v745 = vpop.f32.mrb[0].mxu0
    %v746 = vpop.f32.mrb[0].mxu0
    %v747 = vadd.f32 0.0, %v746
    %v748 = vpop.f32.mrb[0].mxu0
    %749 = vmatprep.mubr.bf16.mxu0 0
    %750 = vmatmul.mubr.bf16.gmra.mrb[0].mxu0 %v356
    %v751 = vpop.f32.mrb[0].mxu0
    %v752 = vadd.f32 0.0, %v751
    %v753 = vpop.f32.mrb[0].mxu0
    %v754 = vpop.f32.mrb[0].mxu0
    %v755 = vadd.f32 0.0, %v754
    %v756 = vpop.f32.mrb[0].mxu0
    %757 = vmatprep.mubr.bf16.mxu0 0
    %758 = vmatmul.mubr.bf16.gmra.mrb[0].mxu0 %v359
    %v759 = vpop.f32.mrb[0].mxu0
    %v760 = vadd.f32 0.0, %v759
    %v761 = vpop.f32.mrb[0].mxu0
    %v762 = vpop.f32.mrb[0].mxu0
    %v763 = vadd.f32 0.0, %v762
    %v764 = vpop.f32.mrb[0].mxu0
    %765 = vdwg.mxu0
    %v766 = vmul.f32 %v736, 0.9
    %v767 = vmul.f32 %v739, 0.9
    %v768 = vmul.f32 %v744, 0.9
    %v769 = vmul.f32 %v747, 0.9
    %v770 = vmul.f32 %v752, 0.9
    %v771 = vmul.f32 %v755, 0.9
    %v772 = vmul.f32 %v760, 0.9
    %v773 = vmul.f32 %v763, 0.9
    %v774 = vadd.f32 %v766, %v316
    %v775 = vadd.f32 %v767, %v317
    %v776 = vadd.f32 %v768, %v318
    %v777 = vadd.f32 %v769, %v319
    %v778 = vadd.f32 %v770, %v320
    %v779 = vadd.f32 %v771, %v321
    %v780 = vadd.f32 %v772, %v322
    %v781 = vadd.f32 %v773, %v323
    %v782 = vpack.c.bf16 %v775, %v774
    %v783 = vpack.c.bf16 %v777, %v776
    %v784 = vpack.c.bf16 %v779, %v778
    %v785 = vpack.c.bf16 %v781, %v780
    %786 = vmatprep.subr.bf16.mxu0 0
    %787 = vmatpush1.bf16.msra.mxu0 %v782
    %788 = vmatprep.subr.bf16.mxu0 0
    %789 = vmatpush1.bf16.msra.mxu0 %v783
    %790 = vmatprep.subr.bf16.mxu0 0
    %791 = vmatpush1.bf16.msra.mxu0 %v784
    %792 = vmatprep.subr.bf16.mxu0 0
    %793 = vmatpush1.bf16.msra.mxu0 %v785
    %794 = vmatprep.subr.bf16.mxu0 0
    %795 = vmatpush1.bf16.msra.mxu0 0
    %796 = vmatprep.subr.bf16.mxu0 0
    %797 = vmatpush1.bf16.msra.mxu0 0
    %798 = vmatprep.subr.bf16.mxu0 0
    %799 = vmatpush1.bf16.msra.mxu0 0
    %800 = vmatprep.subr.bf16.mxu0 0
    %801 = vmatpush1.bf16.msra.mxu0 0
    %802 = vmatprep.subr.bf16.mxu0 0
    %803 = vmatpush1.bf16.msra.mxu0 0
    %804 = vmatprep.subr.bf16.mxu0 0
    %805 = vmatpush1.bf16.msra.mxu0 0
    %806 = vmatprep.subr.bf16.mxu0 0
    %807 = vmatpush1.bf16.msra.mxu0 0
    %808 = vmatprep.subr.bf16.mxu0 0
    %809 = vmatpush1.bf16.msra.mxu0 0
    %810 = vmatprep.subr.bf16.mxu0 0
    %811 = vmatpush1.bf16.msra.mxu0 0
    %812 = vmatprep.subr.bf16.mxu0 0
    %813 = vmatpush1.bf16.msra.mxu0 0
    %814 = vmatprep.subr.bf16.mxu0 0
    %815 = vmatpush1.bf16.msra.mxu0 0
    %816 = vmatprep.subr.bf16.mxu0 0
    %817 = vmatpush1.bf16.msra.mxu0 0
    %818 = vmatprep.mubr.bf16.mxu0 0
    %819 = vmatmul.mubr.bf16.gmra.mrb[0].mxu0 %v350
    %v820 = vpop.f32.mrb[0].mxu0
    %v821 = vadd.f32 0.0, %v820
    %v822 = vpop.f32.mrb[0].mxu0
    %v823 = vpop.f32.mrb[0].mxu0
    %v824 = vadd.f32 0.0, %v823
    %v825 = vpop.f32.mrb[0].mxu0
    %826 = vmatprep.mubr.bf16.mxu0 0
    %827 = vmatmul.mubr.bf16.gmra.mrb[0].mxu0 %v353
    %v828 = vpop.f32.mrb[0].mxu0
    %v829 = vadd.f32 0.0, %v828
    %v830 = vpop.f32.mrb[0].mxu0
    %v831 = vpop.f32.mrb[0].mxu0
    %v832 = vadd.f32 0.0, %v831
    %v833 = vpop.f32.mrb[0].mxu0
    %834 = vmatprep.mubr.bf16.mxu0 0
    %835 = vmatmul.mubr.bf16.gmra.mrb[0].mxu0 %v356
    %v836 = vpop.f32.mrb[0].mxu0
    %v837 = vadd.f32 0.0, %v836
    %v838 = vpop.f32.mrb[0].mxu0
    %v839 = vpop.f32.mrb[0].mxu0
    %v840 = vadd.f32 0.0, %v839
    %v841 = vpop.f32.mrb[0].mxu0
    %842 = vmatprep.mubr.bf16.mxu0 0
    %843 = vmatmul.mubr.bf16.gmra.mrb[0].mxu0 %v359
    %v844 = vpop.f32.mrb[0].mxu0
    %v845 = vadd.f32 0.0, %v844
    %v846 = vpop.f32.mrb[0].mxu0
    %v847 = vpop.f32.mrb[0].mxu0
    %v848 = vadd.f32 0.0, %v847
    %v849 = vpop.f32.mrb[0].mxu0
    %850 = vdwg.mxu0
    %v851 = vmul.f32 %v821, 0.9
    %v852 = vmul.f32 %v824, 0.9
    %v853 = vmul.f32 %v829, 0.9
    %v854 = vmul.f32 %v832, 0.9
    %v855 = vmul.f32 %v837, 0.9
    %v856 = vmul.f32 %v840, 0.9
    %v857 = vmul.f32 %v845, 0.9
    %v858 = vmul.f32 %v848, 0.9
    %v859 = vadd.f32 %v851, %v316
    %v860 = vadd.f32 %v852, %v317
    %v861 = vadd.f32 %v853, %v318
    %v862 = vadd.f32 %v854, %v319
    %v863 = vadd.f32 %v855, %v320
    %v864 = vadd.f32 %v856, %v321
    %v865 = vadd.f32 %v857, %v322
    %v866 = vadd.f32 %v858, %v323
    %v867 = vpack.c.bf16 %v860, %v859
    %v868 = vpack.c.bf16 %v862, %v861
    %v869 = vpack.c.bf16 %v864, %v863
    %v870 = vpack.c.bf16 %v866, %v865
    %871 = vmatprep.subr.bf16.mxu0 0
    %872 = vmatpush1.bf16.msra.mxu0 %v867
    %873 = vmatprep.subr.bf16.mxu0 0
    %874 = vmatpush1.bf16.msra.mxu0 %v868
    %875 = vmatprep.subr.bf16.mxu0 0
    %876 = vmatpush1.bf16.msra.mxu0 %v869
    %877 = vmatprep.subr.bf16.mxu0 0
    %878 = vmatpush1.bf16.msra.mxu0 %v870
    %879 = vmatprep.subr.bf16.mxu0 0
    %880 = vmatpush1.bf16.msra.mxu0 0
    %881 = vmatprep.subr.bf16.mxu0 0
    %882 = vmatpush1.bf16.msra.mxu0 0
    %883 = vmatprep.subr.bf16.mxu0 0
    %884 = vmatpush1.bf16.msra.mxu0 0
    %885 = vmatprep.subr.bf16.mxu0 0
    %886 = vmatpush1.bf16.msra.mxu0 0
    %887 = vmatprep.subr.bf16.mxu0 0
    %888 = vmatpush1.bf16.msra.mxu0 0
    %889 = vmatprep.subr.bf16.mxu0 0
    %890 = vmatpush1.bf16.msra.mxu0 0
    %891 = vmatprep.subr.bf16.mxu0 0
    %892 = vmatpush1.bf16.msra.mxu0 0
    %893 = vmatprep.subr.bf16.mxu0 0
    %894 = vmatpush1.bf16.msra.mxu0 0
    %895 = vmatprep.subr.bf16.mxu0 0
    %896 = vmatpush1.bf16.msra.mxu0 0
    %897 = vmatprep.subr.bf16.mxu0 0
    %898 = vmatpush1.bf16.msra.mxu0 0
    %899 = vmatprep.subr.bf16.mxu0 0
    %900 = vmatpush1.bf16.msra.mxu0 0
    %901 = vmatprep.subr.bf16.mxu0 0
    %902 = vmatpush1.bf16.msra.mxu0 0
    %903 = vmatprep.mubr.bf16.mxu0 0
    %904 = vmatmul.mubr.bf16.gmra.mrb[0].mxu0 %v350
    %v905 = vpop.f32.mrb[0].mxu0
    %v906 = vadd.f32 0.0, %v905
    %v907 = vpop.f32.mrb[0].mxu0
    %v908 = vpop.f32.mrb[0].mxu0
    %v909 = vadd.f32 0.0, %v908
    %v910 = vpop.f32.mrb[0].mxu0
    %911 = vmatprep.mubr.bf16.mxu0 0
    %912 = vmatmul.mubr.bf16.gmra.mrb[0].mxu0 %v353
    %v913 = vpop.f32.mrb[0].mxu0
    %v914 = vadd.f32 0.0, %v913
    %v915 = vpop.f32.mrb[0].mxu0
    %v916 = vpop.f32.mrb[0].mxu0
    %v917 = vadd.f32 0.0, %v916
    %v918 = vpop.f32.mrb[0].mxu0
    %919 = vmatprep.mubr.bf16.mxu0 0
    %920 = vmatmul.mubr.bf16.gmra.mrb[0].mxu0 %v356
    %v921 = vpop.f32.mrb[0].mxu0
    %v922 = vadd.f32 0.0, %v921
    %v923 = vpop.f32.mrb[0].mxu0
    %v924 = vpop.f32.mrb[0].mxu0
    %v925 = vadd.f32 0.0, %v924
    %v926 = vpop.f32.mrb[0].mxu0
    %927 = vmatprep.mubr.bf16.mxu0 0
    %928 = vmatmul.mubr.bf16.gmra.mrb[0].mxu0 %v359
    %v929 = vpop.f32.mrb[0].mxu0
    %v930 = vadd.f32 0.0, %v929
    %v931 = vpop.f32.mrb[0].mxu0
    %v932 = vpop.f32.mrb[0].mxu0
    %v933 = vadd.f32 0.0, %v932
    %v934 = vpop.f32.mrb[0].mxu0
    %935 = vdwg.mxu0
    %v936 = vmul.f32 %v906, 0.9
    %v937 = vmul.f32 %v909, 0.9
    %v938 = vmul.f32 %v914, 0.9
    %v939 = vmul.f32 %v917, 0.9
    %v940 = vmul.f32 %v922, 0.9
    %v941 = vmul.f32 %v925, 0.9
    %v942 = vmul.f32 %v930, 0.9
    %v943 = vmul.f32 %v933, 0.9
    %v944 = vadd.f32 %v936, %v316
    %v945 = vadd.f32 %v937, %v317
    %v946 = vadd.f32 %v938, %v318
    %v947 = vadd.f32 %v939, %v319
    %v948 = vadd.f32 %v940, %v320
    %v949 = vadd.f32 %v941, %v321
    %v950 = vadd.f32 %v942, %v322
    %v951 = vadd.f32 %v943, %v323
    %v952 = vpack.c.bf16 %v945, %v944
    %v953 = vpack.c.bf16 %v947, %v946
    %v954 = vpack.c.bf16 %v949, %v948
    %v955 = vpack.c.bf16 %v951, %v950
    %956 = vmatprep.subr.bf16.mxu0 0
    %957 = vmatpush1.bf16.msra.mxu0 %v952
    %958 = vmatprep.subr.bf16.mxu0 0
    %959 = vmatpush1.bf16.msra.mxu0 %v953
    %960 = vmatprep.subr.bf16.mxu0 0
    %961 = vmatpush1.bf16.msra.mxu0 %v954
    %962 = vmatprep.subr.bf16.mxu0 0
    %963 = vmatpush1.bf16.msra.mxu0 %v955
    %964 = vmatprep.subr.bf16.mxu0 0
    %965 = vmatpush1.bf16.msra.mxu0 0
    %966 = vmatprep.subr.bf16.mxu0 0
    %967 = vmatpush1.bf16.msra.mxu0 0
    %968 = vmatprep.subr.bf16.mxu0 0
    %969 = vmatpush1.bf16.msra.mxu0 0
    %970 = vmatprep.subr.bf16.mxu0 0
    %971 = vmatpush1.bf16.msra.mxu0 0
    %972 = vmatprep.subr.bf16.mxu0 0
    %973 = vmatpush1.bf16.msra.mxu0 0
    %974 = vmatprep.subr.bf16.mxu0 0
    %975 = vmatpush1.bf16.msra.mxu0 0
    %976 = vmatprep.subr.bf16.mxu0 0
    %977 = vmatpush1.bf16.msra.mxu0 0
    %978 = vmatprep.subr.bf16.mxu0 0
    %979 = vmatpush1.bf16.msra.mxu0 0
    %980 = vmatprep.subr.bf16.mxu0 0
    %981 = vmatpush1.bf16.msra.mxu0 0
    %982 = vmatprep.subr.bf16.mxu0 0
    %983 = vmatpush1.bf16.msra.mxu0 0
    %984 = vmatprep.subr.bf16.mxu0 0
    %985 = vmatpush1.bf16.msra.mxu0 0
    %986 = vmatprep.subr.bf16.mxu0 0
    %987 = vmatpush1.bf16.msra.mxu0 0
    %988 = vmatprep.mubr.bf16.mxu0 0
    %989 = vmatmul.mubr.bf16.gmra.mrb[0].mxu0 %v350
    %v990 = vpop.f32.mrb[0].mxu0
    %v991 = vadd.f32 0.0, %v990
    %v992 = vpop.f32.mrb[0].mxu0
    %v993 = vpop.f32.mrb[0].mxu0
    %v994 = vadd.f32 0.0, %v993
    %v995 = vpop.f32.mrb[0].mxu0
    %996 = vmatprep.mubr.bf16.mxu0 0
    %997 = vmatmul.mubr.bf16.gmra.mrb[0].mxu0 %v353
    %v998 = vpop.f32.mrb[0].mxu0
    %v999 = vadd.f32 0.0, %v998
    %v1000 = vpop.f32.mrb[0].mxu0
    %v1001 = vpop.f32.mrb[0].mxu0
    %v1002 = vadd.f32 0.0, %v1001
    %v1003 = vpop.f32.mrb[0].mxu0
    %1004 = vmatprep.mubr.bf16.mxu0 0
    %1005 = vmatmul.mubr.bf16.gmra.mrb[0].mxu0 %v356
    %v1006 = vpop.f32.mrb[0].mxu0
    %v1007 = vadd.f32 0.0, %v1006
    %v1008 = vpop.f32.mrb[0].mxu0
    %v1009 = vpop.f32.mrb[0].mxu0
    %v1010 = vadd.f32 0.0, %v1009
    %v1011 = vpop.f32.mrb[0].mxu0
    %1012 = vmatprep.mubr.bf16.mxu0 0
    %1013 = vmatmul.mubr.bf16.gmra.mrb[0].mxu0 %v359
    %v1014 = vpop.f32.mrb[0].mxu0
    %v1015 = vadd.f32 0.0, %v1014
    %v1016 = vpop.f32.mrb[0].mxu0
    %v1017 = vpop.f32.mrb[0].mxu0
    %v1018 = vadd.f32 0.0, %v1017
    %v1019 = vpop.f32.mrb[0].mxu0
    %1020 = vdwg.mxu0
    %v1021 = vmul.f32 %v991, 0.9
    %v1022 = vmul.f32 %v994, 0.9
    %v1023 = vmul.f32 %v999, 0.9
    %v1024 = vmul.f32 %v1002, 0.9
    %v1025 = vmul.f32 %v1007, 0.9
    %v1026 = vmul.f32 %v1010, 0.9
    %v1027 = vmul.f32 %v1015, 0.9
    %v1028 = vmul.f32 %v1018, 0.9
    %v1029 = vadd.f32 %v1021, %v316
    %v1030 = vadd.f32 %v1022, %v317
    %v1031 = vadd.f32 %v1023, %v318
    %v1032 = vadd.f32 %v1024, %v319
    %v1033 = vadd.f32 %v1025, %v320
    %v1034 = vadd.f32 %v1026, %v321
    %v1035 = vadd.f32 %v1027, %v322
    %v1036 = vadd.f32 %v1028, %v323
    %v1037 = vpack.c.bf16 %v1030, %v1029
    %v1038 = vpack.c.bf16 %v1032, %v1031
    %v1039 = vpack.c.bf16 %v1034, %v1033
    %v1040 = vpack.c.bf16 %v1036, %v1035
    %1041 = vmatprep.subr.bf16.mxu0 0
    %1042 = vmatpush1.bf16.msra.mxu0 %v1037
    %1043 = vmatprep.subr.bf16.mxu0 0
    %1044 = vmatpush1.bf16.msra.mxu0 %v1038
    %1045 = vmatprep.subr.bf16.mxu0 0
    %1046 = vmatpush1.bf16.msra.mxu0 %v1039
    %1047 = vmatprep.subr.bf16.mxu0 0
    %1048 = vmatpush1.bf16.msra.mxu0 %v1040
    %1049 = vmatprep.subr.bf16.mxu0 0
    %1050 = vmatpush1.bf16.msra.mxu0 0
    %1051 = vmatprep.subr.bf16.mxu0 0
    %1052 = vmatpush1.bf16.msra.mxu0 0
    %1053 = vmatprep.subr.bf16.mxu0 0
    %1054 = vmatpush1.bf16.msra.mxu0 0
    %1055 = vmatprep.subr.bf16.mxu0 0
    %1056 = vmatpush1.bf16.msra.mxu0 0
    %1057 = vmatprep.subr.bf16.mxu0 0
    %1058 = vmatpush1.bf16.msra.mxu0 0
    %1059 = vmatprep.subr.bf16.mxu0 0
    %1060 = vmatpush1.bf16.msra.mxu0 0
    %1061 = vmatprep.subr.bf16.mxu0 0
    %1062 = vmatpush1.bf16.msra.mxu0 0
    %1063 = vmatprep.subr.bf16.mxu0 0
    %1064 = vmatpush1.bf16.msra.mxu0 0
    %1065 = vmatprep.subr.bf16.mxu0 0
    %1066 = vmatpush1.bf16.msra.mxu0 0
    %1067 = vmatprep.subr.bf16.mxu0 0
    %1068 = vmatpush1.bf16.msra.mxu0 0
    %1069 = vmatprep.subr.bf16.mxu0 0
    %1070 = vmatpush1.bf16.msra.mxu0 0
    %1071 = vmatprep.subr.bf16.mxu0 0
    %1072 = vmatpush1.bf16.msra.mxu0 0
    %1073 = vmatprep.mubr.bf16.mxu0 0
    %1074 = vmatmul.mubr.bf16.gmra.mrb[0].mxu0 %v350
    %v1075 = vpop.f32.mrb[0].mxu0
    %v1076 = vadd.f32 0.0, %v1075
    %v1077 = vpop.f32.mrb[0].mxu0
    %v1078 = vpop.f32.mrb[0].mxu0
    %v1079 = vadd.f32 0.0, %v1078
    %v1080 = vpop.f32.mrb[0].mxu0
    %1081 = vmatprep.mubr.bf16.mxu0 0
    %1082 = vmatmul.mubr.bf16.gmra.mrb[0].mxu0 %v353
    %v1083 = vpop.f32.mrb[0].mxu0
    %v1084 = vadd.f32 0.0, %v1083
    %v1085 = vpop.f32.mrb[0].mxu0
    %v1086 = vpop.f32.mrb[0].mxu0
    %v1087 = vadd.f32 0.0, %v1086
    %v1088 = vpop.f32.mrb[0].mxu0
    %1089 = vmatprep.mubr.bf16.mxu0 0
    %1090 = vmatmul.mubr.bf16.gmra.mrb[0].mxu0 %v356
    %v1091 = vpop.f32.mrb[0].mxu0
    %v1092 = vadd.f32 0.0, %v1091
    %v1093 = vpop.f32.mrb[0].mxu0
    %v1094 = vpop.f32.mrb[0].mxu0
    %v1095 = vadd.f32 0.0, %v1094
    %v1096 = vpop.f32.mrb[0].mxu0
    %1097 = vmatprep.mubr.bf16.mxu0 0
    %1098 = vmatmul.mubr.bf16.gmra.mrb[0].mxu0 %v359
    %v1099 = vpop.f32.mrb[0].mxu0
    %v1100 = vadd.f32 0.0, %v1099
    %v1101 = vpop.f32.mrb[0].mxu0
    %v1102 = vpop.f32.mrb[0].mxu0
    %v1103 = vadd.f32 0.0, %v1102
    %v1104 = vpop.f32.mrb[0].mxu0
    %1105 = vdwg.mxu0
    %v1106 = vmul.f32 %v1076, 0.9
    %v1107 = vmul.f32 %v1079, 0.9
    %v1108 = vmul.f32 %v1084, 0.9
    %v1109 = vmul.f32 %v1087, 0.9
    %v1110 = vmul.f32 %v1092, 0.9
    %v1111 = vmul.f32 %v1095, 0.9
    %v1112 = vmul.f32 %v1100, 0.9
    %v1113 = vmul.f32 %v1103, 0.9
    %v1114 = vadd.f32 %v1106, %v316
    %v1115 = vadd.f32 %v1107, %v317
    %v1116 = vadd.f32 %v1108, %v318
    %v1117 = vadd.f32 %v1109, %v319
    %v1118 = vadd.f32 %v1110, %v320
    %v1119 = vadd.f32 %v1111, %v321
    %v1120 = vadd.f32 %v1112, %v322
    %v1121 = vadd.f32 %v1113, %v323
    %v1122 = vpack.c.bf16 %v1115, %v1114
    %v1123 = vpack.c.bf16 %v1117, %v1116
    %v1124 = vpack.c.bf16 %v1119, %v1118
    %v1125 = vpack.c.bf16 %v1121, %v1120
    %1126 = vmatprep.subr.bf16.mxu0 0
    %1127 = vmatpush1.bf16.msra.mxu0 %v1122
    %1128 = vmatprep.subr.bf16.mxu0 0
    %1129 = vmatpush1.bf16.msra.mxu0 %v1123
    %1130 = vmatprep.subr.bf16.mxu0 0
    %1131 = vmatpush1.bf16.msra.mxu0 %v1124
    %1132 = vmatprep.subr.bf16.mxu0 0
    %1133 = vmatpush1.bf16.msra.mxu0 %v1125
    %1134 = vmatprep.subr.bf16.mxu0 0
    %1135 = vmatpush1.bf16.msra.mxu0 0
    %1136 = vmatprep.subr.bf16.mxu0 0
    %1137 = vmatpush1.bf16.msra.mxu0 0
    %1138 = vmatprep.subr.bf16.mxu0 0
    %1139 = vmatpush1.bf16.msra.mxu0 0
    %1140 = vmatprep.subr.bf16.mxu0 0
    %1141 = vmatpush1.bf16.msra.mxu0 0
    %1142 = vmatprep.subr.bf16.mxu0 0
    %1143 = vmatpush1.bf16.msra.mxu0 0
    %1144 = vmatprep.subr.bf16.mxu0 0
    %1145 = vmatpush1.bf16.msra.mxu0 0
    %1146 = vmatprep.subr.bf16.mxu0 0
    %1147 = vmatpush1.bf16.msra.mxu0 0
    %1148 = vmatprep.subr.bf16.mxu0 0
    %1149 = vmatpush1.bf16.msra.mxu0 0
    %1150 = vmatprep.subr.bf16.mxu0 0
    %1151 = vmatpush1.bf16.msra.mxu0 0
    %1152 = vmatprep.subr.bf16.mxu0 0
    %1153 = vmatpush1.bf16.msra.mxu0 0
    %1154 = vmatprep.subr.bf16.mxu0 0
    %1155 = vmatpush1.bf16.msra.mxu0 0
    %1156 = vmatprep.subr.bf16.mxu0 0
    %1157 = vmatpush1.bf16.msra.mxu0 0
    %1158 = vmatprep.mubr.bf16.mxu0 0
    %1159 = vmatmul.mubr.bf16.gmra.mrb[0].mxu0 %v350
    %v1160 = vpop.f32.mrb[0].mxu0
    %v1161 = vadd.f32 0.0, %v1160
    %v1162 = vpop.f32.mrb[0].mxu0
    %v1163 = vpop.f32.mrb[0].mxu0
    %v1164 = vadd.f32 0.0, %v1163
    %v1165 = vpop.f32.mrb[0].mxu0
    %1166 = vmatprep.mubr.bf16.mxu0 0
    %1167 = vmatmul.mubr.bf16.gmra.mrb[0].mxu0 %v353
    %v1168 = vpop.f32.mrb[0].mxu0
    %v1169 = vadd.f32 0.0, %v1168
    %v1170 = vpop.f32.mrb[0].mxu0
    %v1171 = vpop.f32.mrb[0].mxu0
    %v1172 = vadd.f32 0.0, %v1171
    %v1173 = vpop.f32.mrb[0].mxu0
    %1174 = vmatprep.mubr.bf16.mxu0 0
    %1175 = vmatmul.mubr.bf16.gmra.mrb[0].mxu0 %v356
    %v1176 = vpop.f32.mrb[0].mxu0
    %v1177 = vadd.f32 0.0, %v1176
    %v1178 = vpop.f32.mrb[0].mxu0
    %v1179 = vpop.f32.mrb[0].mxu0
    %v1180 = vadd.f32 0.0, %v1179
    %v1181 = vpop.f32.mrb[0].mxu0
    %1182 = vmatprep.mubr.bf16.mxu0 0
    %1183 = vmatmul.mubr.bf16.gmra.mrb[0].mxu0 %v359
    %v1184 = vpop.f32.mrb[0].mxu0
    %v1185 = vadd.f32 0.0, %v1184
    %v1186 = vpop.f32.mrb[0].mxu0
    %v1187 = vpop.f32.mrb[0].mxu0
    %v1188 = vadd.f32 0.0, %v1187
    %v1189 = vpop.f32.mrb[0].mxu0
    %1190 = vdwg.mxu0
    %v1191 = vmul.f32 %v1161, 0.9
    %v1192 = vmul.f32 %v1164, 0.9
    %v1193 = vmul.f32 %v1169, 0.9
    %v1194 = vmul.f32 %v1172, 0.9
    %v1195 = vmul.f32 %v1177, 0.9
    %v1196 = vmul.f32 %v1180, 0.9
    %v1197 = vmul.f32 %v1185, 0.9
    %v1198 = vmul.f32 %v1188, 0.9
    %v1199 = vadd.f32 %v1191, %v316
    %v1200 = vadd.f32 %v1192, %v317
    %v1201 = vadd.f32 %v1193, %v318
    %v1202 = vadd.f32 %v1194, %v319
    %v1203 = vadd.f32 %v1195, %v320
    %v1204 = vadd.f32 %v1196, %v321
    %v1205 = vadd.f32 %v1197, %v322
    %v1206 = vadd.f32 %v1198, %v323
    %1207 = vst [vmem:[#allocation13] sm:$0xff] %v1199
    %1208 = vst [vmem:[#allocation13 + $0x8] sm:$0xff] %v1200
    %1209 = vst [vmem:[#allocation13 + $0x10] sm:$0xff] %v1201
    %1210 = vst [vmem:[#allocation13 + $0x18] sm:$0xff] %v1202
    %1211 = vst [vmem:[#allocation13 + $0x20] sm:$0xff] %v1203
    %1212 = vst [vmem:[#allocation13 + $0x28] sm:$0xff] %v1204
    %1213 = vst [vmem:[#allocation13 + $0x30] sm:$0xff] %v1205
    %1214 = vst [vmem:[#allocation13 + $0x38] sm:$0xff] %v1206
    // Predicated region
    $region50: #{tpu_custom_call.1} parent=1 // pred_check
      _
    $region51: #{tpu_custom_call.1} parent=1 // pred_check_branch
      %1216 = sbr.rel (0) target = $region53
    $region52: #{tpu_custom_call.1} parent=1 // pred_region
      %s1218 = ssub.s32 1024, 1024
      %1219 = vsyncadd [#allocation4], %s1218
      %s1220 = sshll.u32 [#allocation13], 4
      %s1221 = int_to_ptr.vmem [resolvable:$true] %s1220
      %1226 = dma.vmem_to_hbm [thread:$0]  %s1221, 1024, %s6, [#allocation4], 128, 128, 8
    $region53: #{tpu_custom_call.1} parent=1 // pred_fallthru
      _
    // Predicated region
    $region54: #{tpu_custom_call.1} parent=1 // pred_check
      _
    $region55: #{tpu_custom_call.1} parent=1 // pred_check_branch
      %1228 = sbr.rel (0) target = $region57
    $region56: #{tpu_custom_call.1} parent=1 // pred_region
      %1229 = dma.done [#allocation4], 1024
    $region57: #{tpu_custom_call.1} parent=1 // pred_fallthru
      _
    %1230 = vsyncpa [#allocation3], 1
    %1231 = vsyncpa [#allocation6], 1
    %1232 = vsyncpa [#allocation9], 1
    %1233 = vsyncpa [#allocation12], 1
    %1234 = vsyncpa [#allocation4], 1

</llo_original>
